<compile_context>
chip_gen: v7x
topology: tpu7x:2x2x1
jax: 0.10.0
libtpu: 0.0.40
codegen_flags: <defaults>
</compile_context>

<pallas_src>
import numpy as np
import jax
import jax.numpy as jnp
from jax.experimental import pallas as pl
from jax.experimental.pallas import tpu as pltpu


def _round_up(n, m):
    return ((n + m - 1) // m) * m


def _discriminator_kernel(x_ref, w1_ref, b1_ref, w2_ref, b2_ref, o_ref):
    # x_ref : (TB, D_in)     bf16 flattened image tile
    # w1_ref: (D_in, H_pad)  bf16 first linear weight (transposed, zero-padded)
    # b1_ref: (1, H_pad)     f32
    # w2_ref: (H_pad, O_pad) bf16 second linear weight (transposed, zero-padded)
    # b2_ref: (1, O_pad)     f32
    # o_ref : (TB, O_pad)    f32 sigmoid output (lane-dense, sliced in wrapper)
    x = x_ref[...]
    h = jnp.dot(x, w1_ref[...], preferred_element_type=jnp.float32)   # MXU, f32 acc
    h = jnp.maximum(h + b1_ref[...], 0.0)                             # f32 bias + ReLU (VPU)
    logits = jnp.dot(h.astype(w2_ref.dtype), w2_ref[...],
                     preferred_element_type=jnp.float32) + b2_ref[...]
    o_ref[...] = jax.nn.sigmoid(logits).astype(o_ref.dtype)           # logistic on EUP


def discriminator_forward(x_nchw, w1, b1, w2, b2, *, tb=256):
    """x_nchw: (B, C, H, W) float32. w1:(D_in,400), w2:(400,O) (transposed vs torch).

    Returns (B, O) float32 = sigmoid(relu(x_flat @ w1 + b1) @ w2 + b2).
    """
    B = x_nchw.shape[0]
    x_flat = x_nchw.reshape(B, -1)              # same semantics as torch .view(B, -1)
    D_in, H = w1.shape
    O = w2.shape[1]

    H_pad = _round_up(H, 128)                   # 400 -> 512: lane-dense hidden / clean MXU K
    O_pad = _round_up(O, 128)                   # 8 -> 128: unmasked lane-dense output stores
    TB = min(tb, _round_up(B, 8))               # batch tile (multiple of 8 sublanes)
    B_pad = _round_up(B, TB)

    # Zero padding preserves semantics: relu(x@0 + 0) = 0 hidden columns hit zero
    # rows of w2 and contribute nothing; padded output columns are sliced away.
    x_p = jnp.zeros((B_pad, D_in), jnp.bfloat16).at[:B].set(x_flat.astype(jnp.bfloat16))
    w1_p = jnp.zeros((D_in, H_pad), jnp.bfloat16).at[:, :H].set(w1.astype(jnp.bfloat16))
    b1_p = jnp.zeros((1, H_pad), jnp.float32).at[:, :H].set(b1.reshape(1, -1).astype(jnp.float32))
    w2_p = jnp.zeros((H_pad, O_pad), jnp.bfloat16).at[:H, :O].set(w2.astype(jnp.bfloat16))
    b2_p = jnp.zeros((1, O_pad), jnp.float32).at[:, :O].set(b2.reshape(1, -1).astype(jnp.float32))

    out = pl.pallas_call(
        _discriminator_kernel,
        out_shape=jax.ShapeDtypeStruct((B_pad, O_pad), jnp.float32),
        grid_spec=pltpu.PrefetchScalarGridSpec(
            num_scalar_prefetch=0,
            grid=(B_pad // TB,),
            in_specs=[
                pl.BlockSpec((TB, D_in), lambda i: (i, 0)),       # batch-tiled x
                pl.BlockSpec((D_in, H_pad), lambda i: (0, 0)),    # resident weights
                pl.BlockSpec((1, H_pad), lambda i: (0, 0)),
                pl.BlockSpec((H_pad, O_pad), lambda i: (0, 0)),
                pl.BlockSpec((1, O_pad), lambda i: (0, 0)),
            ],
            out_specs=pl.BlockSpec((TB, O_pad), lambda i: (i, 0)),
        ),
        compiler_params=pltpu.CompilerParams(
            dimension_semantics=("parallel",),
        ),
    )(x_p, w1_p, b1_p, w2_p, b2_p)

    return out[:B, :O]


def init_params(key, image_shape, output_dim, hidden_dim=400):
    """Deterministic init mimicking nn.Linear's uniform(-1/sqrt(fan_in), 1/sqrt(fan_in))."""
    d_in = int(np.prod(image_shape))
    k1, k2, k3, k4 = jax.random.split(key, 4)
    bound1 = 1.0 / np.sqrt(d_in)
    bound2 = 1.0 / np.sqrt(hidden_dim)
    # stored transposed: (in, out)
    w1 = jax.random.uniform(k1, (d_in, hidden_dim), jnp.float32, -bound1, bound1)
    b1 = jax.random.uniform(k2, (hidden_dim,), jnp.float32, -bound1, bound1)
    w2 = jax.random.uniform(k3, (hidden_dim, output_dim), jnp.float32, -bound2, bound2)
    b2 = jax.random.uniform(k4, (output_dim,), jnp.float32, -bound2, bound2)
    return w1, b1, w2, b2


if __name__ == "__main__":
    # Small shapes consistent with the module: grayscale 16x16 image, 8 outputs.
    image_shape = (1, 16, 16)
    output_dim = 8
    batch = 2

    key = jax.random.PRNGKey(0)
    k_x, k_p = jax.random.split(key)
    x = jax.random.normal(k_x, (batch,) + image_shape, dtype=jnp.float32)
    w1, b1, w2, b2 = init_params(k_p, image_shape, output_dim)

    out = discriminator_forward(x, w1, b1, w2, b2)
    out = jax.block_until_ready(out)
    assert out.shape == (batch, output_dim)

    # Pure-JAX reference with the same bf16 matmul / f32 accumulation recipe.
    x_flat = x.reshape(batch, -1)
    h_ref = jnp.maximum(
        jnp.dot(x_flat.astype(jnp.bfloat16), w1.astype(jnp.bfloat16),
                preferred_element_type=jnp.float32) + b1, 0.0)
    logits_ref = jnp.dot(h_ref.astype(jnp.bfloat16), w2.astype(jnp.bfloat16),
                         preferred_element_type=jnp.float32) + b2
    ref_bf16 = jax.nn.sigmoid(logits_ref)
    np.testing.assert_allclose(np.asarray(out), np.asarray(ref_bf16), rtol=1e-2, atol=1e-2)

    # Loose sanity check against the full-f32 reference (bf16 matmul error only).
    h_f32 = jnp.maximum(x_flat @ w1 + b1, 0.0)
    ref_f32 = jax.nn.sigmoid(h_f32 @ w2 + b2)
    np.testing.assert_allclose(np.asarray(out), np.asarray(ref_f32), rtol=5e-2, atol=3e-2)

    print("KERNEL_OK")
</pallas_src>

<mosaic_0001>
module attributes {stable_mosaic.version = 11 : i64} {
  func.func @_discriminator_kernel(%arg0: i32, %arg1: memref<8x256xbf16, #tpu.memory_space<vmem>>, %arg2: memref<256x512xbf16, #tpu.memory_space<vmem>>, %arg3: memref<1x512xf32, #tpu.memory_space<vmem>>, %arg4: memref<512x128xbf16, #tpu.memory_space<vmem>>, %arg5: memref<1x128xf32, #tpu.memory_space<vmem>>, %arg6: memref<8x128xf32, #tpu.memory_space<vmem>>) attributes {dimension_semantics = [#tpu.dimension_semantics<parallel>], iteration_bounds = array<i64: 1>, scalar_prefetch = 0 : i64, scratch_operands = 0 : i64, tpu.core_type = #tpu.core_type<tc>, window_params = [{transform_indices = @transform_0, window_bounds = array<i64: 8, 256>}, {pipeline_mode = #tpu.pipeline_mode<synchronous>, transform_indices = @transform_1, window_bounds = array<i64: 256, 512>}, {pipeline_mode = #tpu.pipeline_mode<synchronous>, transform_indices = @transform_2, window_bounds = array<i64: 1, 512>}, {pipeline_mode = #tpu.pipeline_mode<synchronous>, transform_indices = @transform_3, window_bounds = array<i64: 512, 128>}, {pipeline_mode = #tpu.pipeline_mode<synchronous>, transform_indices = @transform_4, window_bounds = array<i64: 1, 128>}, {transform_indices = @transform_5, window_bounds = array<i64: 8, 128>}]} {
    %c0 = arith.constant 0 : index
    %c0_0 = arith.constant 0 : index
    %0 = vector.load %arg1[%c0, %c0_0] : memref<8x256xbf16, #tpu.memory_space<vmem>>, vector<8x256xbf16>
    %c0_1 = arith.constant 0 : index
    %c0_2 = arith.constant 0 : index
    %1 = vector.load %arg2[%c0_1, %c0_2] : memref<256x512xbf16, #tpu.memory_space<vmem>>, vector<256x512xbf16>
    %cst = arith.constant dense<0.000000e+00> : vector<8x512xf32>
    %2 = tpu.matmul %0, %1, %cst {dimension_numbers = #tpu.dot_dimension_numbers<[1], [0], [0], [1], [0, 0, 1, 1], [], []>} : vector<8x256xbf16>, vector<256x512xbf16>, vector<8x512xf32> -> vector<8x512xf32>
    %c0_3 = arith.constant 0 : index
    %c0_4 = arith.constant 0 : index
    %3 = vector.load %arg3[%c0_3, %c0_4] : memref<1x512xf32, #tpu.memory_space<vmem>>, vector<1x512xf32>
    %4 = vector.broadcast %3 : vector<1x512xf32> to vector<8x512xf32>
    %5 = arith.addf %2, %4 : vector<8x512xf32>
    %cst_5 = arith.constant 0.000000e+00 : f32
    %6 = vector.broadcast %cst_5 : f32 to vector<8x512xf32>
    %7 = arith.maximumf %5, %6 : vector<8x512xf32>
    %8 = arith.truncf %7 : vector<8x512xf32> to vector<8x512xbf16>
    %c0_6 = arith.constant 0 : index
    %c0_7 = arith.constant 0 : index
    %9 = vector.load %arg4[%c0_6, %c0_7] : memref<512x128xbf16, #tpu.memory_space<vmem>>, vector<512x128xbf16>
    %cst_8 = arith.constant dense<0.000000e+00> : vector<8x128xf32>
    %10 = tpu.matmul %8, %9, %cst_8 {dimension_numbers = #tpu.dot_dimension_numbers<[1], [0], [0], [1], [0, 0, 1, 1], [], []>} : vector<8x512xbf16>, vector<512x128xbf16>, vector<8x128xf32> -> vector<8x128xf32>
    %c0_9 = arith.constant 0 : index
    %c0_10 = arith.constant 0 : index
    %11 = vector.load %arg5[%c0_9, %c0_10] : memref<1x128xf32, #tpu.memory_space<vmem>>, vector<1x128xf32>
    %12 = vector.broadcast %11 : vector<1x128xf32> to vector<8x128xf32>
    %13 = arith.addf %10, %12 : vector<8x128xf32>
    %14 = arith.negf %13 : vector<8x128xf32>
    %15 = math.exp %14 : vector<8x128xf32>
    %cst_11 = arith.constant 1.000000e+00 : f32
    %16 = vector.broadcast %cst_11 : f32 to vector<8x128xf32>
    %17 = arith.addf %16, %15 : vector<8x128xf32>
    %18 = arith.divf %16, %17 : vector<8x128xf32>
    %c0_12 = arith.constant 0 : index
    %c0_13 = arith.constant 0 : index
    %19 = vector.load %arg6[%c0_12, %c0_13] : memref<8x128xf32, #tpu.memory_space<vmem>>, vector<8x128xf32>
    tpu.vector_store %arg6[%c0_12, %c0_13], %18 {strides = array<i32>} : memref<8x128xf32, #tpu.memory_space<vmem>>, vector<8x128xf32>,
    return
  }
  func.func @transform_0(%arg0: i32) -> (i32, i32) {
    %c0_i32 = arith.constant 0 : i32
    %c0_i32_0 = arith.constant 0 : i32
    return %arg0, %c0_i32 : i32, i32
  }
  func.func @transform_1(%arg0: i32) -> (i32, i32) {
    %c0_i32 = arith.constant 0 : i32
    %c0_i32_0 = arith.constant 0 : i32
    %c0_i32_1 = arith.constant 0 : i32
    return %c0_i32, %c0_i32_0 : i32, i32
  }
  func.func @transform_2(%arg0: i32) -> (i32, i32) {
    %c0_i32 = arith.constant 0 : i32
    %c0_i32_0 = arith.constant 0 : i32
    %c0_i32_1 = arith.constant 0 : i32
    return %c0_i32, %c0_i32_0 : i32, i32
  }
  func.func @transform_3(%arg0: i32) -> (i32, i32) {
    %c0_i32 = arith.constant 0 : i32
    %c0_i32_0 = arith.constant 0 : i32
    %c0_i32_1 = arith.constant 0 : i32
    return %c0_i32, %c0_i32_0 : i32, i32
  }
  func.func @transform_4(%arg0: i32) -> (i32, i32) {
    %c0_i32 = arith.constant 0 : i32
    %c0_i32_0 = arith.constant 0 : i32
    %c0_i32_1 = arith.constant 0 : i32
    return %c0_i32, %c0_i32_0 : i32, i32
  }
  func.func @transform_5(%arg0: i32) -> (i32, i32) {
    %c0_i32 = arith.constant 0 : i32
    %c0_i32_0 = arith.constant 0 : i32
    return %arg0, %c0_i32 : i32, i32
  }
}

</mosaic_0001>

<llo_original>
// kernel: tpu_custom_call.1
$region0: #{tpu_custom_call.1}
  #allocation0 [shape = 'u32[]', space=smem, size = 0x4, offset = 0x4, fixed_abs, tag = 'smem constant byte address 0x4 - core index']
  #allocation1 [shape = 'u32[144,128]{1,0:T(1,128)}', space=vmem, size = 0x12000, scoped, tag = 'internal scratch']
  %s0 = inlined_call_operand.hbm [shape: bf16[8,256], index: 0, kind: input, shape index: {}]
  %s1 = inlined_call_operand.hbm [shape: bf16[256,512], index: 1, kind: input, shape index: {}]
  %s2 = inlined_call_operand.vmem [shape: f32[1,512], index: 2, kind: input, shape index: {}]
  %s3 = inlined_call_operand.hbm [shape: bf16[512,128], index: 3, kind: input, shape index: {}]
  %s4 = inlined_call_operand.vmem [shape: f32[1,128], index: 4, kind: input, shape index: {}]
  %s5 = inlined_call_operand.hbm [shape: f32[8,128], index: 5, kind: output, shape index: {}]
  %s6 = sld [smem:[#allocation0]]
  $region42: #{tpu_custom_call.1} parent=0
    _
  %s8 = ssub.s32 1, %s6
  %s9 = scalar_select 0, %s8, %s6
  $region1: #{tpu_custom_call.1} parent=0
    #allocation2 [shape = 'u8[4096]{0}', space=vmem, size = 0x1000, scoped, tag = 'input window, operand 0, single buffered']
    #allocation3 [shape = 's32[1]{0}', space=sflag, size = 0x4, scoped, tag = 'scoped memory for tpu_custom_call.1']
    #allocation4 [shape = 's32[1]{0}', space=sflag, size = 0x4, scoped, tag = 'scoped memory for tpu_custom_call.1']
    #allocation5 [shape = 'u8[262144]{0}', space=vmem, size = 0x40000, scoped, tag = 'input window, operand 1, single buffered']
    #allocation6 [shape = 's32[1]{0}', space=sflag, size = 0x4, scoped, tag = 'scoped memory for tpu_custom_call.1']
    #allocation7 [shape = 'u8[131072]{0}', space=vmem, size = 0x20000, scoped, tag = 'input window, operand 3, single buffered']
    #allocation8 [shape = 'u8[4096]{0}', space=vmem, size = 0x1000, scoped, tag = 'output window, operand 0, single buffered']
    %10 = vsyncpa [#allocation3], 0
    %11 = vsyncpa [#allocation6], 0
    %12 = vsyncpa [#allocation4], 0
    // Predicated region
    $region2: #{tpu_custom_call.1} parent=1 // pred_check
      _
    $region3: #{tpu_custom_call.1} parent=1 // pred_check_branch
      %14 = sbr.rel (0) target = $region5
    $region4: #{tpu_custom_call.1} parent=1 // pred_region
      %s16 = ssub.s32 128, 128
      %17 = vsyncadd [#allocation3], %s16
      %s19 = sshll.u32 [#allocation2], 4
      %s20 = int_to_ptr.vmem [resolvable:$true] %s19
      %22 = dma.hbm_to_vmem [thread:$0]  %s0, 128, %s20, [#allocation3]
    $region5: #{tpu_custom_call.1} parent=1 // pred_fallthru
      _
    // Predicated region
    $region6: #{tpu_custom_call.1} parent=1 // pred_check
      _
    $region7: #{tpu_custom_call.1} parent=1 // pred_check_branch
      %24 = sbr.rel (0) target = $region9
    $region8: #{tpu_custom_call.1} parent=1 // pred_region
      %s26 = ssub.s32 8192, 8192
      %27 = vsyncadd [#allocation6], %s26
      %s28 = sshll.u32 [#allocation5], 4
      %s29 = int_to_ptr.vmem [resolvable:$true] %s28
      %34 = dma.hbm_to_vmem [thread:$0]  %s1, 8192, %s29, [#allocation6], 256, 256, 16
    $region9: #{tpu_custom_call.1} parent=1 // pred_fallthru
      _
    // Predicated region
    $region10: #{tpu_custom_call.1} parent=1 // pred_check
      _
    $region11: #{tpu_custom_call.1} parent=1 // pred_check_branch
      %36 = sbr.rel (0) target = $region13
    $region12: #{tpu_custom_call.1} parent=1 // pred_region
      _
    $region13: #{tpu_custom_call.1} parent=1 // pred_fallthru
      _
    // Predicated region
    $region14: #{tpu_custom_call.1} parent=1 // pred_check
      _
    $region15: #{tpu_custom_call.1} parent=1 // pred_check_branch
      %38 = sbr.rel (0) target = $region17
    $region16: #{tpu_custom_call.1} parent=1 // pred_region
      %s40 = ssub.s32 4096, 4096
      %41 = vsyncadd [#allocation6], %s40
      %s42 = sshll.u32 [#allocation7], 4
      %s43 = int_to_ptr.vmem [resolvable:$true] %s42
      %48 = dma.hbm_to_vmem [thread:$0]  %s3, 4096, %s43, [#allocation6], 64, 64, 4
    $region17: #{tpu_custom_call.1} parent=1 // pred_fallthru
      _
    // Predicated region
    $region18: #{tpu_custom_call.1} parent=1 // pred_check
      _
    $region19: #{tpu_custom_call.1} parent=1 // pred_check_branch
      %50 = sbr.rel (0) target = $region21
    $region20: #{tpu_custom_call.1} parent=1 // pred_region
      _
    $region21: #{tpu_custom_call.1} parent=1 // pred_fallthru
      _
    // Predicated region
    $region22: #{tpu_custom_call.1} parent=1 // pred_check
      _
    $region23: #{tpu_custom_call.1} parent=1 // pred_check_branch
      %52 = sbr.rel (0) target = $region25
    $region24: #{tpu_custom_call.1} parent=1 // pred_region
      %53 = dma.done [#allocation3], 128
    $region25: #{tpu_custom_call.1} parent=1 // pred_fallthru
      _
    // Predicated region
    $region26: #{tpu_custom_call.1} parent=1 // pred_check
      _
    $region27: #{tpu_custom_call.1} parent=1 // pred_check_branch
      %55 = sbr.rel (0) target = $region29
    $region28: #{tpu_custom_call.1} parent=1 // pred_region
      %56 = dma.done [#allocation6], 8192
    $region29: #{tpu_custom_call.1} parent=1 // pred_fallthru
      _
    // Predicated region
    $region30: #{tpu_custom_call.1} parent=1 // pred_check
      _
    $region31: #{tpu_custom_call.1} parent=1 // pred_check_branch
      %58 = sbr.rel (0) target = $region33
    $region32: #{tpu_custom_call.1} parent=1 // pred_region
      %59 = dma.done [#allocation6], 4096
    $region33: #{tpu_custom_call.1} parent=1 // pred_fallthru
      _
    %v61 = vld [vmem:[#allocation2] sm:$0xff]
    %v62 = vld [vmem:[#allocation5] sm:$0xff]
    %v63 = vld [vmem:[#allocation5 + $0x8] sm:$0xff]
    %v64 = vld [vmem:[#allocation5 + $0x10] sm:$0xff]
    %v65 = vld [vmem:[#allocation5 + $0x18] sm:$0xff]
    %v66 = vld [vmem:[#allocation5 + $0x20] sm:$0xff]
    %v67 = vld [vmem:[#allocation5 + $0x28] sm:$0xff]
    %v68 = vld [vmem:[#allocation5 + $0x30] sm:$0xff]
    %v69 = vld [vmem:[#allocation5 + $0x38] sm:$0xff]
    %v70 = vld [vmem:[#allocation5 + $0x40] sm:$0xff]
    %v71 = vld [vmem:[#allocation5 + $0x48] sm:$0xff]
    %v72 = vld [vmem:[#allocation5 + $0x50] sm:$0xff]
    %v73 = vld [vmem:[#allocation5 + $0x58] sm:$0xff]
    %v74 = vld [vmem:[#allocation5 + $0x60] sm:$0xff]
    %v75 = vld [vmem:[#allocation5 + $0x68] sm:$0xff]
    %v76 = vld [vmem:[#allocation5 + $0x70] sm:$0xff]
    %v77 = vld [vmem:[#allocation5 + $0x78] sm:$0xff]
    %v78 = vld [vmem:[#allocation5 + $0x80] sm:$0xff]
    %v79 = vld [vmem:[#allocation5 + $0x88] sm:$0xff]
    %v80 = vld [vmem:[#allocation5 + $0x90] sm:$0xff]
    %v81 = vld [vmem:[#allocation5 + $0x98] sm:$0xff]
    %v82 = vld [vmem:[#allocation5 + $0xa0] sm:$0xff]
    %v83 = vld [vmem:[#allocation5 + $0xa8] sm:$0xff]
    %v84 = vld [vmem:[#allocation5 + $0xb0] sm:$0xff]
    %v85 = vld [vmem:[#allocation5 + $0xb8] sm:$0xff]
    %v86 = vld [vmem:[#allocation5 + $0xc0] sm:$0xff]
    %v87 = vld [vmem:[#allocation5 + $0xc8] sm:$0xff]
    %v88 = vld [vmem:[#allocation5 + $0xd0] sm:$0xff]
    %v89 = vld [vmem:[#allocation5 + $0xd8] sm:$0xff]
    %v90 = vld [vmem:[#allocation5 + $0xe0] sm:$0xff]
    %v91 = vld [vmem:[#allocation5 + $0xe8] sm:$0xff]
    %v92 = vld [vmem:[#allocation5 + $0xf0] sm:$0xff]
    %v93 = vld [vmem:[#allocation5 + $0xf8] sm:$0xff]
    %v94 = vld [vmem:[#allocation5 + $0x100] sm:$0xff]
    %v95 = vld [vmem:[#allocation5 + $0x108] sm:$0xff]
    %v96 = vld [vmem:[#allocation5 + $0x110] sm:$0xff]
    %v97 = vld [vmem:[#allocation5 + $0x118] sm:$0xff]
    %v98 = vld [vmem:[#allocation5 + $0x120] sm:$0xff]
    %v99 = vld [vmem:[#allocation5 + $0x128] sm:$0xff]
    %v100 = vld [vmem:[#allocation5 + $0x130] sm:$0xff]
    %v101 = vld [vmem:[#allocation5 + $0x138] sm:$0xff]
    %v102 = vld [vmem:[#allocation5 + $0x140] sm:$0xff]
    %v103 = vld [vmem:[#allocation5 + $0x148] sm:$0xff]
    %v104 = vld [vmem:[#allocation5 + $0x150] sm:$0xff]
    %v105 = vld [vmem:[#allocation5 + $0x158] sm:$0xff]
    %v106 = vld [vmem:[#allocation5 + $0x160] sm:$0xff]
    %v107 = vld [vmem:[#allocation5 + $0x168] sm:$0xff]
    %v108 = vld [vmem:[#allocation5 + $0x170] sm:$0xff]
    %v109 = vld [vmem:[#allocation5 + $0x178] sm:$0xff]
    %v110 = vld [vmem:[#allocation5 + $0x180] sm:$0xff]
    %v111 = vld [vmem:[#allocation5 + $0x188] sm:$0xff]
    %v112 = vld [vmem:[#allocation5 + $0x190] sm:$0xff]
    %v113 = vld [vmem:[#allocation5 + $0x198] sm:$0xff]
    %v114 = vld [vmem:[#allocation5 + $0x1a0] sm:$0xff]
    %v115 = vld [vmem:[#allocation5 + $0x1a8] sm:$0xff]
    %v116 = vld [vmem:[#allocation5 + $0x1b0] sm:$0xff]
    %v117 = vld [vmem:[#allocation5 + $0x1b8] sm:$0xff]
    %v118 = vld [vmem:[#allocation5 + $0x1c0] sm:$0xff]
    %v119 = vld [vmem:[#allocation5 + $0x1c8] sm:$0xff]
    %v120 = vld [vmem:[#allocation5 + $0x1d0] sm:$0xff]
    %v121 = vld [vmem:[#allocation5 + $0x1d8] sm:$0xff]
    %v122 = vld [vmem:[#allocation5 + $0x1e0] sm:$0xff]
    %v123 = vld [vmem:[#allocation5 + $0x1e8] sm:$0xff]
    %v124 = vld [vmem:[#allocation5 + $0x1f0] sm:$0xff]
    %v125 = vld [vmem:[#allocation5 + $0x1f8] sm:$0xff]
    %v126 = vld [vmem:[%s2] sm:$0xf]
    %v128 = vlaneseq
    %v129 = vshrl.u32 %v128, 7
    %v130 = vsub.s32 0, %v129
    %v131 = vrot.slane %v126, %v130
    %v132 = vlaneseq
    %v133 = vshrl.u32 %v132, 7
    %v134 = vsub.s32 1, %v133
    %v135 = vrot.slane %v126, %v134
    %v136 = vlaneseq
    %v137 = vshrl.u32 %v136, 7
    %v138 = vsub.s32 2, %v137
    %v139 = vrot.slane %v126, %v138
    %v140 = vlaneseq
    %v141 = vshrl.u32 %v140, 7
    %v142 = vsub.s32 3, %v141
    %v143 = vrot.slane %v126, %v142
    %v149 = vunpack.c.l.b16 %v61
    %v150 = vunpack.c.h.b16 %v61
    %v151 = vpack.c.b16 %v149, %v149
    %v152 = vpack.c.b16 %v150, %v150
    %v219 = vunpack.c.l.b16 %v62
    %v220 = vunpack.c.h.b16 %v62
    %v221 = vunpack.c.l.b16 %v63
    %v222 = vunpack.c.h.b16 %v63
    %v223 = vunpack.c.l.b16 %v64
    %v224 = vunpack.c.h.b16 %v64
    %v225 = vunpack.c.l.b16 %v65
    %v226 = vunpack.c.h.b16 %v65
    %v227 = vunpack.c.l.b16 %v66
    %v228 = vunpack.c.h.b16 %v66
    %v229 = vunpack.c.l.b16 %v67
    %v230 = vunpack.c.h.b16 %v67
    %v231 = vunpack.c.l.b16 %v68
    %v232 = vunpack.c.h.b16 %v68
    %v233 = vunpack.c.l.b16 %v69
    %v234 = vunpack.c.h.b16 %v69
    %v235 = vunpack.c.l.b16 %v70
    %v236 = vunpack.c.h.b16 %v70
    %v237 = vunpack.c.l.b16 %v71
    %v238 = vunpack.c.h.b16 %v71
    %v239 = vunpack.c.l.b16 %v72
    %v240 = vunpack.c.h.b16 %v72
    %v241 = vunpack.c.l.b16 %v73
    %v242 = vunpack.c.h.b16 %v73
    %v243 = vunpack.c.l.b16 %v74
    %v244 = vunpack.c.h.b16 %v74
    %v245 = vunpack.c.l.b16 %v75
    %v246 = vunpack.c.h.b16 %v75
    %v247 = vunpack.c.l.b16 %v76
    %v248 = vunpack.c.h.b16 %v76
    %v249 = vunpack.c.l.b16 %v77
    %v250 = vunpack.c.h.b16 %v77
    %v251 = vunpack.c.l.b16 %v78
    %v252 = vunpack.c.h.b16 %v78
    %v253 = vunpack.c.l.b16 %v79
    %v254 = vunpack.c.h.b16 %v79
    %v255 = vunpack.c.l.b16 %v80
    %v256 = vunpack.c.h.b16 %v80
    %v257 = vunpack.c.l.b16 %v81
    %v258 = vunpack.c.h.b16 %v81
    %v259 = vunpack.c.l.b16 %v82
    %v260 = vunpack.c.h.b16 %v82
    %v261 = vunpack.c.l.b16 %v83
    %v262 = vunpack.c.h.b16 %v83
    %v263 = vunpack.c.l.b16 %v84
    %v264 = vunpack.c.h.b16 %v84
    %v265 = vunpack.c.l.b16 %v85
    %v266 = vunpack.c.h.b16 %v85
    %v267 = vunpack.c.l.b16 %v86
    %v268 = vunpack.c.h.b16 %v86
    %v269 = vunpack.c.l.b16 %v87
    %v270 = vunpack.c.h.b16 %v87
    %v271 = vunpack.c.l.b16 %v88
    %v272 = vunpack.c.h.b16 %v88
    %v273 = vunpack.c.l.b16 %v89
    %v274 = vunpack.c.h.b16 %v89
    %v275 = vunpack.c.l.b16 %v90
    %v276 = vunpack.c.h.b16 %v90
    %v277 = vunpack.c.l.b16 %v91
    %v278 = vunpack.c.h.b16 %v91
    %v279 = vunpack.c.l.b16 %v92
    %v280 = vunpack.c.h.b16 %v92
    %v281 = vunpack.c.l.b16 %v93
    %v282 = vunpack.c.h.b16 %v93
    %v283 = vunpack.c.l.b16 %v94
    %v284 = vunpack.c.h.b16 %v94
    %v285 = vunpack.c.l.b16 %v95
    %v286 = vunpack.c.h.b16 %v95
    %v287 = vunpack.c.l.b16 %v96
    %v288 = vunpack.c.h.b16 %v96
    %v289 = vunpack.c.l.b16 %v97
    %v290 = vunpack.c.h.b16 %v97
    %v291 = vunpack.c.l.b16 %v98
    %v292 = vunpack.c.h.b16 %v98
    %v293 = vunpack.c.l.b16 %v99
    %v294 = vunpack.c.h.b16 %v99
    %v295 = vunpack.c.l.b16 %v100
    %v296 = vunpack.c.h.b16 %v100
    %v297 = vunpack.c.l.b16 %v101
    %v298 = vunpack.c.h.b16 %v101
    %v299 = vunpack.c.l.b16 %v102
    %v300 = vunpack.c.h.b16 %v102
    %v301 = vunpack.c.l.b16 %v103
    %v302 = vunpack.c.h.b16 %v103
    %v303 = vunpack.c.l.b16 %v104
    %v304 = vunpack.c.h.b16 %v104
    %v305 = vunpack.c.l.b16 %v105
    %v306 = vunpack.c.h.b16 %v105
    %v307 = vunpack.c.l.b16 %v106
    %v308 = vunpack.c.h.b16 %v106
    %v309 = vunpack.c.l.b16 %v107
    %v310 = vunpack.c.h.b16 %v107
    %v311 = vunpack.c.l.b16 %v108
    %v312 = vunpack.c.h.b16 %v108
    %v313 = vunpack.c.l.b16 %v109
    %v314 = vunpack.c.h.b16 %v109
    %v315 = vunpack.c.l.b16 %v110
    %v316 = vunpack.c.h.b16 %v110
    %v317 = vunpack.c.l.b16 %v111
    %v318 = vunpack.c.h.b16 %v111
    %v319 = vunpack.c.l.b16 %v112
    %v320 = vunpack.c.h.b16 %v112
    %v321 = vunpack.c.l.b16 %v113
    %v322 = vunpack.c.h.b16 %v113
    %v323 = vunpack.c.l.b16 %v114
    %v324 = vunpack.c.h.b16 %v114
    %v325 = vunpack.c.l.b16 %v115
    %v326 = vunpack.c.h.b16 %v115
    %v327 = vunpack.c.l.b16 %v116
    %v328 = vunpack.c.h.b16 %v116
    %v329 = vunpack.c.l.b16 %v117
    %v330 = vunpack.c.h.b16 %v117
    %v331 = vunpack.c.l.b16 %v118
    %v332 = vunpack.c.h.b16 %v118
    %v333 = vunpack.c.l.b16 %v119
    %v334 = vunpack.c.h.b16 %v119
    %v335 = vunpack.c.l.b16 %v120
    %v336 = vunpack.c.h.b16 %v120
    %v337 = vunpack.c.l.b16 %v121
    %v338 = vunpack.c.h.b16 %v121
    %v339 = vunpack.c.l.b16 %v122
    %v340 = vunpack.c.h.b16 %v122
    %v341 = vunpack.c.l.b16 %v123
    %v342 = vunpack.c.h.b16 %v123
    %v343 = vunpack.c.l.b16 %v124
    %v344 = vunpack.c.h.b16 %v124
    %v345 = vunpack.c.l.b16 %v125
    %v346 = vunpack.c.h.b16 %v125
    %v347 = vpack.c.b16 %v223, %v219
    %v348 = vpack.c.b16 %v224, %v220
    %v349 = vpack.c.b16 %v225, %v221
    %v350 = vpack.c.b16 %v226, %v222
    %v351 = vpack.c.b16 %v231, %v227
    %v352 = vpack.c.b16 %v232, %v228
    %v353 = vpack.c.b16 %v233, %v229
    %v354 = vpack.c.b16 %v234, %v230
    %v355 = vpack.c.b16 %v239, %v235
    %v356 = vpack.c.b16 %v240, %v236
    %v357 = vpack.c.b16 %v241, %v237
    %v358 = vpack.c.b16 %v242, %v238
    %v359 = vpack.c.b16 %v247, %v243
    %v360 = vpack.c.b16 %v248, %v244
    %v361 = vpack.c.b16 %v249, %v245
    %v362 = vpack.c.b16 %v250, %v246
    %v363 = vpack.c.b16 %v255, %v251
    %v364 = vpack.c.b16 %v256, %v252
    %v365 = vpack.c.b16 %v257, %v253
    %v366 = vpack.c.b16 %v258, %v254
    %v367 = vpack.c.b16 %v263, %v259
    %v368 = vpack.c.b16 %v264, %v260
    %v369 = vpack.c.b16 %v265, %v261
    %v370 = vpack.c.b16 %v266, %v262
    %v371 = vpack.c.b16 %v271, %v267
    %v372 = vpack.c.b16 %v272, %v268
    %v373 = vpack.c.b16 %v273, %v269
    %v374 = vpack.c.b16 %v274, %v270
    %v375 = vpack.c.b16 %v279, %v275
    %v376 = vpack.c.b16 %v280, %v276
    %v377 = vpack.c.b16 %v281, %v277
    %v378 = vpack.c.b16 %v282, %v278
    %v379 = vpack.c.b16 %v287, %v283
    %v380 = vpack.c.b16 %v288, %v284
    %v381 = vpack.c.b16 %v289, %v285
    %v382 = vpack.c.b16 %v290, %v286
    %v383 = vpack.c.b16 %v295, %v291
    %v384 = vpack.c.b16 %v296, %v292
    %v385 = vpack.c.b16 %v297, %v293
    %v386 = vpack.c.b16 %v298, %v294
    %v387 = vpack.c.b16 %v303, %v299
    %v388 = vpack.c.b16 %v304, %v300
    %v389 = vpack.c.b16 %v305, %v301
    %v390 = vpack.c.b16 %v306, %v302
    %v391 = vpack.c.b16 %v311, %v307
    %v392 = vpack.c.b16 %v312, %v308
    %v393 = vpack.c.b16 %v313, %v309
    %v394 = vpack.c.b16 %v314, %v310
    %v395 = vpack.c.b16 %v319, %v315
    %v396 = vpack.c.b16 %v320, %v316
    %v397 = vpack.c.b16 %v321, %v317
    %v398 = vpack.c.b16 %v322, %v318
    %v399 = vpack.c.b16 %v327, %v323
    %v400 = vpack.c.b16 %v328, %v324
    %v401 = vpack.c.b16 %v329, %v325
    %v402 = vpack.c.b16 %v330, %v326
    %v403 = vpack.c.b16 %v335, %v331
    %v404 = vpack.c.b16 %v336, %v332
    %v405 = vpack.c.b16 %v337, %v333
    %v406 = vpack.c.b16 %v338, %v334
    %v407 = vpack.c.b16 %v343, %v339
    %v408 = vpack.c.b16 %v344, %v340
    %v409 = vpack.c.b16 %v345, %v341
    %v410 = vpack.c.b16 %v346, %v342
    %475 = vmatprep.subr.bf16.mxu0 %v348
    %476 = vmatpush1.bf16.msra.mxu0 %v347
    %477 = vmatprep.subr.bf16.mxu0 %v352
    %478 = vmatpush1.bf16.msra.mxu0 %v351
    %479 = vmatprep.subr.bf16.mxu0 %v356
    %480 = vmatpush1.bf16.msra.mxu0 %v355
    %481 = vmatprep.subr.bf16.mxu0 %v360
    %482 = vmatpush1.bf16.msra.mxu0 %v359
    %483 = vmatprep.subr.bf16.mxu0 %v364
    %484 = vmatpush1.bf16.msra.mxu0 %v363
    %485 = vmatprep.subr.bf16.mxu0 %v368
    %486 = vmatpush1.bf16.msra.mxu0 %v367
    %487 = vmatprep.subr.bf16.mxu0 %v372
    %488 = vmatpush1.bf16.msra.mxu0 %v371
    %489 = vmatprep.subr.bf16.mxu0 %v376
    %490 = vmatpush1.bf16.msra.mxu0 %v375
    %491 = vmatprep.subr.bf16.mxu0 %v380
    %492 = vmatpush1.bf16.msra.mxu0 %v379
    %493 = vmatprep.subr.bf16.mxu0 %v384
    %494 = vmatpush1.bf16.msra.mxu0 %v383
    %495 = vmatprep.subr.bf16.mxu0 %v388
    %496 = vmatpush1.bf16.msra.mxu0 %v387
    %497 = vmatprep.subr.bf16.mxu0 %v392
    %498 = vmatpush1.bf16.msra.mxu0 %v391
    %499 = vmatprep.subr.bf16.mxu0 %v396
    %500 = vmatpush1.bf16.msra.mxu0 %v395
    %501 = vmatprep.subr.bf16.mxu0 %v400
    %502 = vmatpush1.bf16.msra.mxu0 %v399
    %503 = vmatprep.subr.bf16.mxu0 %v404
    %504 = vmatpush1.bf16.msra.mxu0 %v403
    %505 = vmatprep.subr.bf16.mxu0 %v408
    %506 = vmatpush1.bf16.msra.mxu0 %v407
    %507 = vmatprep.mubr.bf16.mxu0 %v152
    %508 = vmatmul.mubr.bf16.gmra.mrb[0].mxu0 %v151
    %v509 = vpop.f32.mrb[0].mxu0
    %v510 = vadd.f32 %v131, %v509
    %v511 = vpop.f32.mrb[0].mxu0
    %v512 = vadd.f32 %v135, %v511
    %v513 = vpop.f32.mrb[0].mxu0
    %v514 = vpop.f32.mrb[0].mxu0
    %515 = vdwg.mxu0
    %516 = vmatprep.subr.bf16.mxu0 %v350
    %517 = vmatpush1.bf16.msra.mxu0 %v349
    %518 = vmatprep.subr.bf16.mxu0 %v354
    %519 = vmatpush1.bf16.msra.mxu0 %v353
    %520 = vmatprep.subr.bf16.mxu0 %v358
    %521 = vmatpush1.bf16.msra.mxu0 %v357
    %522 = vmatprep.subr.bf16.mxu0 %v362
    %523 = vmatpush1.bf16.msra.mxu0 %v361
    %524 = vmatprep.subr.bf16.mxu0 %v366
    %525 = vmatpush1.bf16.msra.mxu0 %v365
    %526 = vmatprep.subr.bf16.mxu0 %v370
    %527 = vmatpush1.bf16.msra.mxu0 %v369
    %528 = vmatprep.subr.bf16.mxu0 %v374
    %529 = vmatpush1.bf16.msra.mxu0 %v373
    %530 = vmatprep.subr.bf16.mxu0 %v378
    %531 = vmatpush1.bf16.msra.mxu0 %v377
    %532 = vmatprep.subr.bf16.mxu0 %v382
    %533 = vmatpush1.bf16.msra.mxu0 %v381
    %534 = vmatprep.subr.bf16.mxu0 %v386
    %535 = vmatpush1.bf16.msra.mxu0 %v385
    %536 = vmatprep.subr.bf16.mxu0 %v390
    %537 = vmatpush1.bf16.msra.mxu0 %v389
    %538 = vmatprep.subr.bf16.mxu0 %v394
    %539 = vmatpush1.bf16.msra.mxu0 %v393
    %540 = vmatprep.subr.bf16.mxu0 %v398
    %541 = vmatpush1.bf16.msra.mxu0 %v397
    %542 = vmatprep.subr.bf16.mxu0 %v402
    %543 = vmatpush1.bf16.msra.mxu0 %v401
    %544 = vmatprep.subr.bf16.mxu0 %v406
    %545 = vmatpush1.bf16.msra.mxu0 %v405
    %546 = vmatprep.subr.bf16.mxu0 %v410
    %547 = vmatpush1.bf16.msra.mxu0 %v409
    %548 = vmatprep.mubr.bf16.mxu0 %v152
    %549 = vmatmul.mubr.bf16.gmra.mrb[0].mxu0 %v151
    %v550 = vpop.f32.mrb[0].mxu0
    %v551 = vadd.f32 %v139, %v550
    %v552 = vpop.f32.mrb[0].mxu0
    %v553 = vadd.f32 %v143, %v552
    %v554 = vpop.f32.mrb[0].mxu0
    %v555 = vpop.f32.mrb[0].mxu0
    %556 = vdwg.mxu0
    %v557 = vmax.f32 %v510, 0.0
    %v558 = vmax.f32 %v512, 0.0
    %v559 = vmax.f32 %v551, 0.0
    %v560 = vmax.f32 %v553, 0.0
    %v561 = vpack.c.bf16 %v557, %v557
    %v562 = vpack.c.bf16 %v558, %v558
    %v563 = vpack.c.bf16 %v559, %v559
    %v564 = vpack.c.bf16 %v560, %v560
    %v565 = vld [vmem:[#allocation7] sm:$0xf]
    %v566 = vld [vmem:[#allocation7 + $0x4] sm:$0xf]
    %v567 = vld [vmem:[#allocation7 + $0x8] sm:$0xf]
    %v568 = vld [vmem:[#allocation7 + $0xc] sm:$0xf]
    %v569 = vld [vmem:[#allocation7 + $0x10] sm:$0xf]
    %v570 = vld [vmem:[#allocation7 + $0x14] sm:$0xf]
    %v571 = vld [vmem:[#allocation7 + $0x18] sm:$0xf]
    %v572 = vld [vmem:[#allocation7 + $0x1c] sm:$0xf]
    %v573 = vld [vmem:[#allocation7 + $0x20] sm:$0xf]
    %v574 = vld [vmem:[#allocation7 + $0x24] sm:$0xf]
    %v575 = vld [vmem:[#allocation7 + $0x28] sm:$0xf]
    %v576 = vld [vmem:[#allocation7 + $0x2c] sm:$0xf]
    %v577 = vld [vmem:[#allocation7 + $0x30] sm:$0xf]
    %v578 = vld [vmem:[#allocation7 + $0x34] sm:$0xf]
    %v579 = vld [vmem:[#allocation7 + $0x38] sm:$0xf]
    %v580 = vld [vmem:[#allocation7 + $0x3c] sm:$0xf]
    %v581 = vld [vmem:[#allocation7 + $0x40] sm:$0xf]
    %v582 = vld [vmem:[#allocation7 + $0x44] sm:$0xf]
    %v583 = vld [vmem:[#allocation7 + $0x48] sm:$0xf]
    %v584 = vld [vmem:[#allocation7 + $0x4c] sm:$0xf]
    %v585 = vld [vmem:[#allocation7 + $0x50] sm:$0xf]
    %v586 = vld [vmem:[#allocation7 + $0x54] sm:$0xf]
    %v587 = vld [vmem:[#allocation7 + $0x58] sm:$0xf]
    %v588 = vld [vmem:[#allocation7 + $0x5c] sm:$0xf]
    %v589 = vld [vmem:[#allocation7 + $0x60] sm:$0xf]
    %v590 = vld [vmem:[#allocation7 + $0x64] sm:$0xf]
    %v591 = vld [vmem:[#allocation7 + $0x68] sm:$0xf]
    %v592 = vld [vmem:[#allocation7 + $0x6c] sm:$0xf]
    %v593 = vld [vmem:[#allocation7 + $0x70] sm:$0xf]
    %v594 = vld [vmem:[#allocation7 + $0x74] sm:$0xf]
    %v595 = vld [vmem:[#allocation7 + $0x78] sm:$0xf]
    %v596 = vld [vmem:[#allocation7 + $0x7c] sm:$0xf]
    %v597 = vld [vmem:[#allocation7 + $0x80] sm:$0xf]
    %v598 = vld [vmem:[#allocation7 + $0x84] sm:$0xf]
    %v599 = vld [vmem:[#allocation7 + $0x88] sm:$0xf]
    %v600 = vld [vmem:[#allocation7 + $0x8c] sm:$0xf]
    %v601 = vld [vmem:[#allocation7 + $0x90] sm:$0xf]
    %v602 = vld [vmem:[#allocation7 + $0x94] sm:$0xf]
    %v603 = vld [vmem:[#allocation7 + $0x98] sm:$0xf]
    %v604 = vld [vmem:[#allocation7 + $0x9c] sm:$0xf]
    %v605 = vld [vmem:[#allocation7 + $0xa0] sm:$0xf]
    %v606 = vld [vmem:[#allocation7 + $0xa4] sm:$0xf]
    %v607 = vld [vmem:[#allocation7 + $0xa8] sm:$0xf]
    %v608 = vld [vmem:[#allocation7 + $0xac] sm:$0xf]
    %v609 = vld [vmem:[#allocation7 + $0xb0] sm:$0xf]
    %v610 = vld [vmem:[#allocation7 + $0xb4] sm:$0xf]
    %v611 = vld [vmem:[#allocation7 + $0xb8] sm:$0xf]
    %v612 = vld [vmem:[#allocation7 + $0xbc] sm:$0xf]
    %v613 = vld [vmem:[#allocation7 + $0xc0] sm:$0xf]
    %v614 = vld [vmem:[#allocation7 + $0xc4] sm:$0xf]
    %v615 = vld [vmem:[#allocation7 + $0xc8] sm:$0xf]
    %v616 = vld [vmem:[#allocation7 + $0xcc] sm:$0xf]
    %v617 = vld [vmem:[#allocation7 + $0xd0] sm:$0xf]
    %v618 = vld [vmem:[#allocation7 + $0xd4] sm:$0xf]
    %v619 = vld [vmem:[#allocation7 + $0xd8] sm:$0xf]
    %v620 = vld [vmem:[#allocation7 + $0xdc] sm:$0xf]
    %v621 = vld [vmem:[#allocation7 + $0xe0] sm:$0xf]
    %v622 = vld [vmem:[#allocation7 + $0xe4] sm:$0xf]
    %v623 = vld [vmem:[#allocation7 + $0xe8] sm:$0xf]
    %v624 = vld [vmem:[#allocation7 + $0xec] sm:$0xf]
    %v625 = vld [vmem:[#allocation7 + $0xf0] sm:$0xf]
    %v626 = vld [vmem:[#allocation7 + $0xf4] sm:$0xf]
    %v627 = vld [vmem:[#allocation7 + $0xf8] sm:$0xf]
    %v628 = vld [vmem:[#allocation7 + $0xfc] sm:$0xf]
    %v629 = vld [vmem:[%s4] sm:$0x1]
    %v631 = vlaneseq
    %v632 = vshrl.u32 %v631, 7
    %v633 = vsub.s32 0, %v632
    %v634 = vrot.slane %v629, %v633
    %v700 = vunpack.c.l.b16 %v565
    %v701 = vunpack.c.l.b16 %v566
    %v702 = vunpack.c.l.b16 %v567
    %v703 = vunpack.c.l.b16 %v568
    %v704 = vunpack.c.l.b16 %v569
    %v705 = vunpack.c.l.b16 %v570
    %v706 = vunpack.c.l.b16 %v571
    %v707 = vunpack.c.l.b16 %v572
    %v708 = vunpack.c.l.b16 %v573
    %v709 = vunpack.c.l.b16 %v574
    %v710 = vunpack.c.l.b16 %v575
    %v711 = vunpack.c.l.b16 %v576
    %v712 = vunpack.c.l.b16 %v577
    %v713 = vunpack.c.l.b16 %v578
    %v714 = vunpack.c.l.b16 %v579
    %v715 = vunpack.c.l.b16 %v580
    %v716 = vunpack.c.l.b16 %v581
    %v717 = vunpack.c.l.b16 %v582
    %v718 = vunpack.c.l.b16 %v583
    %v719 = vunpack.c.l.b16 %v584
    %v720 = vunpack.c.l.b16 %v585
    %v721 = vunpack.c.l.b16 %v586
    %v722 = vunpack.c.l.b16 %v587
    %v723 = vunpack.c.l.b16 %v588
    %v724 = vunpack.c.l.b16 %v589
    %v725 = vunpack.c.l.b16 %v590
    %v726 = vunpack.c.l.b16 %v591
    %v727 = vunpack.c.l.b16 %v592
    %v728 = vunpack.c.l.b16 %v593
    %v729 = vunpack.c.l.b16 %v594
    %v730 = vunpack.c.l.b16 %v595
    %v731 = vunpack.c.l.b16 %v596
    %v732 = vunpack.c.l.b16 %v597
    %v733 = vunpack.c.l.b16 %v598
    %v734 = vunpack.c.l.b16 %v599
    %v735 = vunpack.c.l.b16 %v600
    %v736 = vunpack.c.l.b16 %v601
    %v737 = vunpack.c.l.b16 %v602
    %v738 = vunpack.c.l.b16 %v603
    %v739 = vunpack.c.l.b16 %v604
    %v740 = vunpack.c.l.b16 %v605
    %v741 = vunpack.c.l.b16 %v606
    %v742 = vunpack.c.l.b16 %v607
    %v743 = vunpack.c.l.b16 %v608
    %v744 = vunpack.c.l.b16 %v609
    %v745 = vunpack.c.l.b16 %v610
    %v746 = vunpack.c.l.b16 %v611
    %v747 = vunpack.c.l.b16 %v612
    %v748 = vunpack.c.l.b16 %v613
    %v749 = vunpack.c.l.b16 %v614
    %v750 = vunpack.c.l.b16 %v615
    %v751 = vunpack.c.l.b16 %v616
    %v752 = vunpack.c.l.b16 %v617
    %v753 = vunpack.c.l.b16 %v618
    %v754 = vunpack.c.l.b16 %v619
    %v755 = vunpack.c.l.b16 %v620
    %v756 = vunpack.c.l.b16 %v621
    %v757 = vunpack.c.l.b16 %v622
    %v758 = vunpack.c.l.b16 %v623
    %v759 = vunpack.c.l.b16 %v624
    %v760 = vunpack.c.l.b16 %v625
    %v761 = vunpack.c.l.b16 %v626
    %v762 = vunpack.c.l.b16 %v627
    %v763 = vunpack.c.l.b16 %v628
    %v764 = vpack.c.b16 %v701, %v700
    %v765 = vpack.c.b16 %v703, %v702
    %v766 = vpack.c.b16 %v705, %v704
    %v767 = vpack.c.b16 %v707, %v706
    %v768 = vpack.c.b16 %v709, %v708
    %v769 = vpack.c.b16 %v711, %v710
    %v770 = vpack.c.b16 %v713, %v712
    %v771 = vpack.c.b16 %v715, %v714
    %v772 = vpack.c.b16 %v717, %v716
    %v773 = vpack.c.b16 %v719, %v718
    %v774 = vpack.c.b16 %v721, %v720
    %v775 = vpack.c.b16 %v723, %v722
    %v776 = vpack.c.b16 %v725, %v724
    %v777 = vpack.c.b16 %v727, %v726
    %v778 = vpack.c.b16 %v729, %v728
    %v779 = vpack.c.b16 %v731, %v730
    %v780 = vpack.c.b16 %v733, %v732
    %v781 = vpack.c.b16 %v735, %v734
    %v782 = vpack.c.b16 %v737, %v736
    %v783 = vpack.c.b16 %v739, %v738
    %v784 = vpack.c.b16 %v741, %v740
    %v785 = vpack.c.b16 %v743, %v742
    %v786 = vpack.c.b16 %v745, %v744
    %v787 = vpack.c.b16 %v747, %v746
    %v788 = vpack.c.b16 %v749, %v748
    %v789 = vpack.c.b16 %v751, %v750
    %v790 = vpack.c.b16 %v753, %v752
    %v791 = vpack.c.b16 %v755, %v754
    %v792 = vpack.c.b16 %v757, %v756
    %v793 = vpack.c.b16 %v759, %v758
    %v794 = vpack.c.b16 %v761, %v760
    %v795 = vpack.c.b16 %v763, %v762
    %828 = vmatprep.subr.bf16.mxu0 0
    %829 = vmatpush1.bf16.msra.mxu0 %v764
    %830 = vmatprep.subr.bf16.mxu0 0
    %831 = vmatpush1.bf16.msra.mxu0 %v765
    %832 = vmatprep.subr.bf16.mxu0 0
    %833 = vmatpush1.bf16.msra.mxu0 %v766
    %834 = vmatprep.subr.bf16.mxu0 0
    %835 = vmatpush1.bf16.msra.mxu0 %v767
    %836 = vmatprep.subr.bf16.mxu0 0
    %837 = vmatpush1.bf16.msra.mxu0 %v768
    %838 = vmatprep.subr.bf16.mxu0 0
    %839 = vmatpush1.bf16.msra.mxu0 %v769
    %840 = vmatprep.subr.bf16.mxu0 0
    %841 = vmatpush1.bf16.msra.mxu0 %v770
    %842 = vmatprep.subr.bf16.mxu0 0
    %843 = vmatpush1.bf16.msra.mxu0 %v771
    %844 = vmatprep.subr.bf16.mxu0 0
    %845 = vmatpush1.bf16.msra.mxu0 %v772
    %846 = vmatprep.subr.bf16.mxu0 0
    %847 = vmatpush1.bf16.msra.mxu0 %v773
    %848 = vmatprep.subr.bf16.mxu0 0
    %849 = vmatpush1.bf16.msra.mxu0 %v774
    %850 = vmatprep.subr.bf16.mxu0 0
    %851 = vmatpush1.bf16.msra.mxu0 %v775
    %852 = vmatprep.subr.bf16.mxu0 0
    %853 = vmatpush1.bf16.msra.mxu0 %v776
    %854 = vmatprep.subr.bf16.mxu0 0
    %855 = vmatpush1.bf16.msra.mxu0 %v777
    %856 = vmatprep.subr.bf16.mxu0 0
    %857 = vmatpush1.bf16.msra.mxu0 %v778
    %858 = vmatprep.subr.bf16.mxu0 0
    %859 = vmatpush1.bf16.msra.mxu0 %v779
    %860 = vmatprep.mubr.bf16.mxu0 %v562
    %861 = vmatmul.mubr.bf16.gmra.mrb[0].mxu0 %v561
    %v862 = vpop.f32.mrb[0].mxu0
    %v863 = vadd.f32 %v634, %v862
    %v864 = vpop.f32.mrb[0].mxu0
    %v865 = vpop.f32.mrb[0].mxu0
    %v866 = vpop.f32.mrb[0].mxu0
    %867 = vdwg.mxu0
    %868 = vmatprep.subr.bf16.mxu0 0
    %869 = vmatpush1.bf16.msra.mxu0 %v780
    %870 = vmatprep.subr.bf16.mxu0 0
    %871 = vmatpush1.bf16.msra.mxu0 %v781
    %872 = vmatprep.subr.bf16.mxu0 0
    %873 = vmatpush1.bf16.msra.mxu0 %v782
    %874 = vmatprep.subr.bf16.mxu0 0
    %875 = vmatpush1.bf16.msra.mxu0 %v783
    %876 = vmatprep.subr.bf16.mxu0 0
    %877 = vmatpush1.bf16.msra.mxu0 %v784
    %878 = vmatprep.subr.bf16.mxu0 0
    %879 = vmatpush1.bf16.msra.mxu0 %v785
    %880 = vmatprep.subr.bf16.mxu0 0
    %881 = vmatpush1.bf16.msra.mxu0 %v786
    %882 = vmatprep.subr.bf16.mxu0 0
    %883 = vmatpush1.bf16.msra.mxu0 %v787
    %884 = vmatprep.subr.bf16.mxu0 0
    %885 = vmatpush1.bf16.msra.mxu0 %v788
    %886 = vmatprep.subr.bf16.mxu0 0
    %887 = vmatpush1.bf16.msra.mxu0 %v789
    %888 = vmatprep.subr.bf16.mxu0 0
    %889 = vmatpush1.bf16.msra.mxu0 %v790
    %890 = vmatprep.subr.bf16.mxu0 0
    %891 = vmatpush1.bf16.msra.mxu0 %v791
    %892 = vmatprep.subr.bf16.mxu0 0
    %893 = vmatpush1.bf16.msra.mxu0 %v792
    %894 = vmatprep.subr.bf16.mxu0 0
    %895 = vmatpush1.bf16.msra.mxu0 %v793
    %896 = vmatprep.subr.bf16.mxu0 0
    %897 = vmatpush1.bf16.msra.mxu0 %v794
    %898 = vmatprep.subr.bf16.mxu0 0
    %899 = vmatpush1.bf16.msra.mxu0 %v795
    %900 = vmatprep.mubr.bf16.mxu0 %v564
    %901 = vmatmul.mubr.bf16.gmra.mrb[0].mxu0 %v563
    %v902 = vpop.f32.mrb[0].mxu0
    %v903 = vadd.f32 %v863, %v902
    %v904 = vpop.f32.mrb[0].mxu0
    %v905 = vpop.f32.mrb[0].mxu0
    %v906 = vpop.f32.mrb[0].mxu0
    %907 = vdwg.mxu0
    %v908 = vxor.u32 %v903, 2147483648
    %v909 = vmul.f32 %v908, 1.442695
    %v910 = vpow.pop %v909
    %v911 = vadd.f32 %v910, 1.0
    %v912 = vrcp.pop %v911
    %v913 = vmul.f32 1.0, %v912
    %914 = vst [vmem:[#allocation8] sm:$0xff] %v913
    // Predicated region
    $region34: #{tpu_custom_call.1} parent=1 // pred_check
      _
    $region35: #{tpu_custom_call.1} parent=1 // pred_check_branch
      %916 = sbr.rel (0) target = $region37
    $region36: #{tpu_custom_call.1} parent=1 // pred_region
      %s918 = ssub.s32 128, 128
      %919 = vsyncadd [#allocation4], %s918
      %s921 = sshll.u32 [#allocation8], 4
      %s922 = int_to_ptr.vmem [resolvable:$true] %s921
      %924 = dma.vmem_to_hbm [thread:$0]  %s922, 128, %s5, [#allocation4]
    $region37: #{tpu_custom_call.1} parent=1 // pred_fallthru
      _
    // Predicated region
    $region38: #{tpu_custom_call.1} parent=1 // pred_check
      _
    $region39: #{tpu_custom_call.1} parent=1 // pred_check_branch
      %926 = sbr.rel (0) target = $region41
    $region40: #{tpu_custom_call.1} parent=1 // pred_region
      %927 = dma.done [#allocation4], 128
    $region41: #{tpu_custom_call.1} parent=1 // pred_fallthru
      _
    %928 = vsyncpa [#allocation3], 1
    %929 = vsyncpa [#allocation6], 1
    %930 = vsyncpa [#allocation4], 1

</llo_original>
